<compile_context>
chip_gen: v7x
topology: tpu7x:2x2x1
jax: 0.10.0
libtpu: 0.0.40
codegen_flags: <defaults>
</compile_context>

<pallas_src>
import math

import jax
import jax.numpy as jnp
from jax.experimental import pallas as pl
from jax.experimental.pallas import tpu as pltpu

# ---------------- config (small, consistent with the module) ----------------
BATCH = 2
SEQ = 8
HIDDEN = 32
NUM_HEADS = 4
HEAD_DIM = HIDDEN // NUM_HEADS
MASK_FILL = -1000000000.0          # matches the module's masked_fill value


# ------------------------------- kernel -------------------------------------
def bert_self_attention_kernel(x_ref, mask_ref, wq_ref, wk_ref, wv_ref,
                               bq_ref, bk_ref, bv_ref, out_ref):
    """One (batch b, head h) grid step.

    x_ref    : (1, S, H)   f32   hidden states of batch b
    mask_ref : (1, 1, S)   f32   key-padding mask of batch b
    w*_ref   : (1, H, HD)  f32   head-h projection weights (Q has 1/sqrt(d) folded)
    b*_ref   : (1, 1, HD)  f32   head-h projection biases
    out_ref  : (1, 1, S, HD)     per-head context for (b, h)
    """
    f32 = jnp.float32
    bf16 = jnp.bfloat16

    x = x_ref[0].astype(bf16)                     # (S, H) bf16 MXU operand
    wq = wq_ref[0].astype(bf16)                   # (H, HD)
    wk = wk_ref[0].astype(bf16)
    wv = wv_ref[0].astype(bf16)

    # ---- head-specific Q/K/V projections (bf16 operands, f32 accumulation) ----
    q = jnp.dot(x, wq, preferred_element_type=f32) + bq_ref[0]   # (S, HD) f32
    k = jnp.dot(x, wk, preferred_element_type=f32) + bk_ref[0]   # (S, HD) f32
    v = jnp.dot(x, wv, preferred_element_type=f32) + bv_ref[0]   # (S, HD) f32

    # ---- scores: contract head_dim; scale already folded into Q weights ----
    s = jnp.einsum("qd,kd->qk", q.astype(bf16), k.astype(bf16),
                   preferred_element_type=f32)                   # (S, S) f32

    # ---- key-padding mask: one (1, S) compare broadcast over query rows ----
    key_ok = mask_ref[0] != 0.0                                  # (1, S) bool
    s = jnp.where(key_ok, s, f32(MASK_FILL))

    # ---- numerically-stable softmax in f32, normalization deferred ----
    s = s - jnp.max(s, axis=-1, keepdims=True)
    p = jnp.exp(s)                                               # unnormalized
    l = jnp.sum(p, axis=-1, keepdims=True)                       # (S, 1)

    # ---- context, then normalize the small (S, HD) tensor, not (S, S) ----
    ctx = jnp.dot(p.astype(bf16), v.astype(bf16),
                  preferred_element_type=f32)                    # (S, HD) f32
    ctx = ctx * pl.reciprocal(l, approx=True)                    # EUP slot

    out_ref[0, 0] = ctx.astype(out_ref.dtype)


# ------------------------------- wrapper -------------------------------------
def prepare_params(wq, bq, wk, bk, wv, bv, num_heads, head_dim):
    """One-off host-side re-layout: head-major weights/biases, 1/sqrt(d) folded
    into Q.  Shapes: weights (NH, H, HD), biases (NH, 1, HD)."""
    H = wq.shape[0]
    inv = 1.0 / math.sqrt(head_dim)

    def w_heads(w):                         # (H, H) -> (NH, H, HD)
        return w.reshape(H, num_heads, head_dim).transpose(1, 0, 2)

    def b_heads(b):                         # (1, H) -> (NH, 1, HD)
        return b.reshape(num_heads, head_dim)[:, None, :]

    return (w_heads(wq * inv), w_heads(wk), w_heads(wv),
            b_heads(bq * inv), b_heads(bk), b_heads(bv))


def bert_self_attention(x, mask, wq_h, wk_h, wv_h, bq_h, bk_h, bv_h):
    """x: (B, S, H) f32; mask: (B, 1, 1, S); head-major weights/biases."""
    B, S, H = x.shape
    NH, _, HD = wq_h.shape
    mask_b = mask.reshape(B, 1, S)

    x_spec = pl.BlockSpec((1, S, H), lambda b, h: (b, 0, 0))
    m_spec = pl.BlockSpec((1, 1, S), lambda b, h: (b, 0, 0))
    w_spec = pl.BlockSpec((1, H, HD), lambda b, h: (h, 0, 0))
    b_spec = pl.BlockSpec((1, 1, HD), lambda b, h: (h, 0, 0))
    out_spec = pl.BlockSpec((1, 1, S, HD), lambda b, h: (b, h, 0, 0))

    out = pl.pallas_call(
        bert_self_attention_kernel,
        out_shape=jax.ShapeDtypeStruct((B, NH, S, HD), x.dtype),
        grid=(B, NH),
        in_specs=[x_spec, m_spec, w_spec, w_spec, w_spec,
                  b_spec, b_spec, b_spec],
        out_specs=out_spec,
        compiler_params=pltpu.CompilerParams(
            dimension_semantics=("parallel", "parallel")),
    )(x, mask_b, wq_h, wk_h, wv_h, bq_h, bk_h, bv_h)

    # Head merge is wrapper-side layout plumbing (kernel stores stay full-minor).
    return out.transpose(0, 2, 1, 3).reshape(B, S, H)


# --------------------------- pure-JAX reference -------------------------------
def bert_self_attention_ref(x, mask, params):
    B, S, H = x.shape

    def lin(v, w, b):
        return v @ w + b[0]

    def split(t):
        return t.reshape(B, S, NUM_HEADS, HEAD_DIM).transpose(0, 2, 1, 3)

    q = split(lin(x, params["wq"], params["bq"]))
    k = split(lin(x, params["wk"], params["bk"]))
    v = split(lin(x, params["wv"], params["bv"]))
    s = jnp.einsum("bhqd,bhkd->bhqk", q, k) / math.sqrt(HEAD_DIM)
    s = jnp.where(mask == 0.0, jnp.float32(MASK_FILL), s)
    p = jax.nn.softmax(s, axis=-1)
    ctx = jnp.einsum("bhqk,bhkd->bhqd", p, v).transpose(0, 2, 1, 3).reshape(B, S, H)
    return ctx


# --------------------------------- main ---------------------------------------
if __name__ == "__main__":
    key = jax.random.PRNGKey(0)
    ks = jax.random.split(key, 10)

    def w(k, shape, scale=0.05):
        return (scale * jax.random.normal(k, shape)).astype(jnp.float32)

    H = HIDDEN
    params = {
        "wq": w(ks[0], (H, H)), "bq": w(ks[1], (1, H)),
        "wk": w(ks[2], (H, H)), "bk": w(ks[3], (1, H)),
        "wv": w(ks[4], (H, H)), "bv": w(ks[5], (1, H)),
    }

    x = jax.random.normal(ks[6], (BATCH, SEQ, HIDDEN)).astype(jnp.float32)
    mask = (jax.random.uniform(ks[7], (BATCH, 1, 1, SEQ)) > 0.3).astype(jnp.float32)

    # one-off host-side parameter re-layout (not a per-call wrapper op)
    wq_h, wk_h, wv_h, bq_h, bk_h, bv_h = prepare_params(
        params["wq"], params["bq"], params["wk"], params["bk"],
        params["wv"], params["bv"], NUM_HEADS, HEAD_DIM)

    out = jax.block_until_ready(
        bert_self_attention(x, mask, wq_h, wk_h, wv_h, bq_h, bk_h, bv_h))
    ref = jax.block_until_ready(bert_self_attention_ref(x, mask, params))

    assert out.shape == (BATCH, SEQ, HIDDEN)
    # tolerance covers bf16 MXU operands (f32 accumulation) and the EUP
    # approximate reciprocal used for the deferred softmax normalization
    assert jnp.allclose(out, ref, atol=5e-3, rtol=5e-3), \
        float(jnp.max(jnp.abs(out - ref)))
    print("KERNEL_OK")
</pallas_src>

<mosaic_0001>
module attributes {stable_mosaic.version = 11 : i64} {
  func.func @bert_self_attention_kernel(%arg0: i32, %arg1: i32, %arg2: memref<1x8x32xf32, #tpu.memory_space<vmem>>, %arg3: memref<1x1x8xf32, #tpu.memory_space<vmem>>, %arg4: memref<1x32x8xf32, #tpu.memory_space<vmem>>, %arg5: memref<1x32x8xf32, #tpu.memory_space<vmem>>, %arg6: memref<1x32x8xf32, #tpu.memory_space<vmem>>, %arg7: memref<1x1x8xf32, #tpu.memory_space<vmem>>, %arg8: memref<1x1x8xf32, #tpu.memory_space<vmem>>, %arg9: memref<1x1x8xf32, #tpu.memory_space<vmem>>, %arg10: memref<1x1x8x8xf32, #tpu.memory_space<vmem>>) attributes {dimension_semantics = [#tpu.dimension_semantics<parallel>, #tpu.dimension_semantics<parallel>], iteration_bounds = array<i64: 2, 4>, scalar_prefetch = 0 : i64, scratch_operands = 0 : i64, tpu.core_type = #tpu.core_type<tc>, window_params = [{transform_indices = @transform_0, window_bounds = array<i64: 1, 8, 32>}, {transform_indices = @transform_1, window_bounds = array<i64: 1, 1, 8>}, {transform_indices = @transform_2, window_bounds = array<i64: 1, 32, 8>}, {transform_indices = @transform_3, window_bounds = array<i64: 1, 32, 8>}, {transform_indices = @transform_4, window_bounds = array<i64: 1, 32, 8>}, {transform_indices = @transform_5, window_bounds = array<i64: 1, 1, 8>}, {transform_indices = @transform_6, window_bounds = array<i64: 1, 1, 8>}, {transform_indices = @transform_7, window_bounds = array<i64: 1, 1, 8>}, {transform_indices = @transform_8, window_bounds = array<i64: 1, 1, 8, 8>}]} {
    %c0 = arith.constant 0 : index
    %c0_0 = arith.constant 0 : index
    %c0_1 = arith.constant 0 : index
    %0 = vector.load %arg2[%c0, %c0_0, %c0_1] : memref<1x8x32xf32, #tpu.memory_space<vmem>>, vector<1x8x32xf32>
    %1 = vector.shape_cast %0 : vector<1x8x32xf32> to vector<8x32xf32>
    %2 = arith.truncf %1 : vector<8x32xf32> to vector<8x32xbf16>
    %c0_2 = arith.constant 0 : index
    %c0_3 = arith.constant 0 : index
    %c0_4 = arith.constant 0 : index
    %3 = vector.load %arg4[%c0_2, %c0_3, %c0_4] : memref<1x32x8xf32, #tpu.memory_space<vmem>>, vector<1x32x8xf32>
    %4 = vector.shape_cast %3 : vector<1x32x8xf32> to vector<32x8xf32>
    %5 = arith.truncf %4 : vector<32x8xf32> to vector<32x8xbf16>
    %c0_5 = arith.constant 0 : index
    %c0_6 = arith.constant 0 : index
    %c0_7 = arith.constant 0 : index
    %6 = vector.load %arg5[%c0_5, %c0_6, %c0_7] : memref<1x32x8xf32, #tpu.memory_space<vmem>>, vector<1x32x8xf32>
    %7 = vector.shape_cast %6 : vector<1x32x8xf32> to vector<32x8xf32>
    %8 = arith.truncf %7 : vector<32x8xf32> to vector<32x8xbf16>
    %c0_8 = arith.constant 0 : index
    %c0_9 = arith.constant 0 : index
    %c0_10 = arith.constant 0 : index
    %9 = vector.load %arg6[%c0_8, %c0_9, %c0_10] : memref<1x32x8xf32, #tpu.memory_space<vmem>>, vector<1x32x8xf32>
    %10 = vector.shape_cast %9 : vector<1x32x8xf32> to vector<32x8xf32>
    %11 = arith.truncf %10 : vector<32x8xf32> to vector<32x8xbf16>
    %cst = arith.constant dense<0.000000e+00> : vector<8x8xf32>
    %12 = tpu.matmul %2, %5, %cst {dimension_numbers = #tpu.dot_dimension_numbers<[1], [0], [0], [1], [0, 0, 1, 1], [], []>} : vector<8x32xbf16>, vector<32x8xbf16>, vector<8x8xf32> -> vector<8x8xf32>
    %c0_11 = arith.constant 0 : index
    %c0_12 = arith.constant 0 : index
    %c0_13 = arith.constant 0 : index
    %13 = vector.load %arg7[%c0_11, %c0_12, %c0_13] : memref<1x1x8xf32, #tpu.memory_space<vmem>>, vector<1x1x8xf32>
    %14 = vector.shape_cast %13 : vector<1x1x8xf32> to vector<1x8xf32>
    %15 = vector.broadcast %14 : vector<1x8xf32> to vector<8x8xf32>
    %16 = arith.addf %12, %15 : vector<8x8xf32>
    %cst_14 = arith.constant dense<0.000000e+00> : vector<8x8xf32>
    %17 = tpu.matmul %2, %8, %cst_14 {dimension_numbers = #tpu.dot_dimension_numbers<[1], [0], [0], [1], [0, 0, 1, 1], [], []>} : vector<8x32xbf16>, vector<32x8xbf16>, vector<8x8xf32> -> vector<8x8xf32>
    %c0_15 = arith.constant 0 : index
    %c0_16 = arith.constant 0 : index
    %c0_17 = arith.constant 0 : index
    %18 = vector.load %arg8[%c0_15, %c0_16, %c0_17] : memref<1x1x8xf32, #tpu.memory_space<vmem>>, vector<1x1x8xf32>
    %19 = vector.shape_cast %18 : vector<1x1x8xf32> to vector<1x8xf32>
    %20 = vector.broadcast %19 : vector<1x8xf32> to vector<8x8xf32>
    %21 = arith.addf %17, %20 : vector<8x8xf32>
    %cst_18 = arith.constant dense<0.000000e+00> : vector<8x8xf32>
    %22 = tpu.matmul %2, %11, %cst_18 {dimension_numbers = #tpu.dot_dimension_numbers<[1], [0], [0], [1], [0, 0, 1, 1], [], []>} : vector<8x32xbf16>, vector<32x8xbf16>, vector<8x8xf32> -> vector<8x8xf32>
    %c0_19 = arith.constant 0 : index
    %c0_20 = arith.constant 0 : index
    %c0_21 = arith.constant 0 : index
    %23 = vector.load %arg9[%c0_19, %c0_20, %c0_21] : memref<1x1x8xf32, #tpu.memory_space<vmem>>, vector<1x1x8xf32>
    %24 = vector.shape_cast %23 : vector<1x1x8xf32> to vector<1x8xf32>
    %25 = vector.broadcast %24 : vector<1x8xf32> to vector<8x8xf32>
    %26 = arith.addf %22, %25 : vector<8x8xf32>
    %27 = arith.truncf %16 : vector<8x8xf32> to vector<8x8xbf16>
    %28 = arith.truncf %21 : vector<8x8xf32> to vector<8x8xbf16>
    "tpu.trace_start"() <{level = 10 : i32, message = "qd,kd->qk"}> : () -> ()
    %cst_22 = arith.constant dense<0.000000e+00> : vector<8x8xf32>
    %29 = tpu.matmul %27, %28, %cst_22 {dimension_numbers = #tpu.dot_dimension_numbers<[1], [1], [0], [0], [0, 0, 1, 0], [], []>} : vector<8x8xbf16>, vector<8x8xbf16>, vector<8x8xf32> -> vector<8x8xf32>
    "tpu.trace_stop"() : () -> ()
    %c0_23 = arith.constant 0 : index
    %c0_24 = arith.constant 0 : index
    %c0_25 = arith.constant 0 : index
    %30 = vector.load %arg3[%c0_23, %c0_24, %c0_25] : memref<1x1x8xf32, #tpu.memory_space<vmem>>, vector<1x1x8xf32>
    %31 = vector.shape_cast %30 : vector<1x1x8xf32> to vector<1x8xf32>
    %cst_26 = arith.constant 0.000000e+00 : f32
    %32 = vector.broadcast %cst_26 : f32 to vector<1x8xf32>
    %33 = arith.cmpf one, %31, %32 : vector<1x8xf32>
    %cst_27 = arith.constant -1.000000e+09 : f32
    %34 = vector.shape_cast %33 : vector<1x8xi1> to vector<1x8xi1>
    %35 = vector.broadcast %34 : vector<1x8xi1> to vector<8x8xi1>
    %36 = vector.broadcast %cst_27 : f32 to vector<8x8xf32>
    %37 = arith.select %35, %29, %36 : vector<8x8xi1>, vector<8x8xf32>
    %cst_28 = arith.constant dense<0xFF800000> : vector<8xf32>
    %38 = vector.multi_reduction <maximumf>, %37, %cst_28 [1] : vector<8x8xf32> to vector<8xf32>
    %39 = vector.shape_cast %38 : vector<8xf32> to vector<8x1xf32>
    %40 = vector.broadcast %39 : vector<8x1xf32> to vector<8x8xf32>
    %41 = arith.subf %37, %40 : vector<8x8xf32>
    %42 = math.exp %41 : vector<8x8xf32>
    %cst_29 = arith.constant dense<0.000000e+00> : vector<8xf32>
    %43 = vector.multi_reduction <add>, %42, %cst_29 [1] : vector<8x8xf32> to vector<8xf32>
    %44 = vector.shape_cast %43 : vector<8xf32> to vector<8x1xf32>
    %45 = arith.truncf %42 : vector<8x8xf32> to vector<8x8xbf16>
    %46 = arith.truncf %26 : vector<8x8xf32> to vector<8x8xbf16>
    %cst_30 = arith.constant dense<0.000000e+00> : vector<8x8xf32>
    %47 = tpu.matmul %45, %46, %cst_30 {dimension_numbers = #tpu.dot_dimension_numbers<[1], [0], [0], [1], [0, 0, 1, 1], [], []>} : vector<8x8xbf16>, vector<8x8xbf16>, vector<8x8xf32> -> vector<8x8xf32>
    %48 = tpu.reciprocal %44 {approx = true} : vector<8x1xf32> -> vector<8x1xf32>
    %49 = vector.broadcast %48 : vector<8x1xf32> to vector<8x8xf32>
    %50 = arith.mulf %47, %49 : vector<8x8xf32>
    %c0_31 = arith.constant 0 : index
    %c0_32 = arith.constant 0 : index
    %c0_33 = arith.constant 0 : index
    %c0_34 = arith.constant 0 : index
    %51 = vector.load %arg10[%c0_31, %c0_32, %c0_33, %c0_34] : memref<1x1x8x8xf32, #tpu.memory_space<vmem>>, vector<1x1x8x8xf32>
    %52 = vector.shape_cast %51 : vector<1x1x8x8xf32> to vector<8x8xf32>
    %53 = vector.shape_cast %50 : vector<8x8xf32> to vector<1x1x8x8xf32>
    tpu.vector_store %arg10[%c0_31, %c0_32, %c0_33, %c0_34], %53 {strides = array<i32>} : memref<1x1x8x8xf32, #tpu.memory_space<vmem>>, vector<1x1x8x8xf32>,
    return
  }
  func.func @transform_0(%arg0: i32, %arg1: i32) -> (i32, i32, i32) {
    %c0_i32 = arith.constant 0 : i32
    %c0_i32_0 = arith.constant 0 : i32
    %c0_i32_1 = arith.constant 0 : i32
    return %arg0, %c0_i32, %c0_i32_0 : i32, i32, i32
  }
  func.func @transform_1(%arg0: i32, %arg1: i32) -> (i32, i32, i32) {
    %c0_i32 = arith.constant 0 : i32
    %c0_i32_0 = arith.constant 0 : i32
    %c0_i32_1 = arith.constant 0 : i32
    return %arg0, %c0_i32, %c0_i32_0 : i32, i32, i32
  }
  func.func @transform_2(%arg0: i32, %arg1: i32) -> (i32, i32, i32) {
    %c0_i32 = arith.constant 0 : i32
    %c0_i32_0 = arith.constant 0 : i32
    %c0_i32_1 = arith.constant 0 : i32
    return %arg1, %c0_i32, %c0_i32_0 : i32, i32, i32
  }
  func.func @transform_3(%arg0: i32, %arg1: i32) -> (i32, i32, i32) {
    %c0_i32 = arith.constant 0 : i32
    %c0_i32_0 = arith.constant 0 : i32
    %c0_i32_1 = arith.constant 0 : i32
    return %arg1, %c0_i32, %c0_i32_0 : i32, i32, i32
  }
  func.func @transform_4(%arg0: i32, %arg1: i32) -> (i32, i32, i32) {
    %c0_i32 = arith.constant 0 : i32
    %c0_i32_0 = arith.constant 0 : i32
    %c0_i32_1 = arith.constant 0 : i32
    return %arg1, %c0_i32, %c0_i32_0 : i32, i32, i32
  }
  func.func @transform_5(%arg0: i32, %arg1: i32) -> (i32, i32, i32) {
    %c0_i32 = arith.constant 0 : i32
    %c0_i32_0 = arith.constant 0 : i32
    %c0_i32_1 = arith.constant 0 : i32
    return %arg1, %c0_i32, %c0_i32_0 : i32, i32, i32
  }
  func.func @transform_6(%arg0: i32, %arg1: i32) -> (i32, i32, i32) {
    %c0_i32 = arith.constant 0 : i32
    %c0_i32_0 = arith.constant 0 : i32
    %c0_i32_1 = arith.constant 0 : i32
    return %arg1, %c0_i32, %c0_i32_0 : i32, i32, i32
  }
  func.func @transform_7(%arg0: i32, %arg1: i32) -> (i32, i32, i32) {
    %c0_i32 = arith.constant 0 : i32
    %c0_i32_0 = arith.constant 0 : i32
    %c0_i32_1 = arith.constant 0 : i32
    return %arg1, %c0_i32, %c0_i32_0 : i32, i32, i32
  }
  func.func @transform_8(%arg0: i32, %arg1: i32) -> (i32, i32, i32, i32) {
    %c0_i32 = arith.constant 0 : i32
    %c0_i32_0 = arith.constant 0 : i32
    %c0_i32_1 = arith.constant 0 : i32
    return %arg0, %arg1, %c0_i32, %c0_i32_0 : i32, i32, i32, i32
  }
}

</mosaic_0001>

<llo_original>
// kernel: tpu_custom_call.1
$region0: #{tpu_custom_call.1}
  #allocation0 [shape = 'u32[]', space=smem, size = 0x4, offset = 0x4, fixed_abs, tag = 'smem constant byte address 0x4 - core index']
  #allocation1 [shape = 'u32[144,128]{1,0:T(1,128)}', space=vmem, size = 0x12000, scoped, tag = 'internal scratch']
  %s0 = inlined_call_operand.vmem [shape: f32[2,8,32], index: 0, kind: input, shape index: {}]
  %s1 = inlined_call_operand.vmem [shape: f32[2,1,8], index: 1, kind: input, shape index: {}]
  %s2 = inlined_call_operand.vmem [shape: f32[4,32,8], index: 2, kind: input, shape index: {}]
  %s3 = inlined_call_operand.vmem [shape: f32[4,32,8], index: 3, kind: input, shape index: {}]
  %s4 = inlined_call_operand.vmem [shape: f32[4,32,8], index: 4, kind: input, shape index: {}]
  %s5 = inlined_call_operand.vmem [shape: f32[4,1,8], index: 5, kind: input, shape index: {}]
  %s6 = inlined_call_operand.vmem [shape: f32[4,1,8], index: 6, kind: input, shape index: {}]
  %s7 = inlined_call_operand.vmem [shape: f32[4,1,8], index: 7, kind: input, shape index: {}]
  %s8 = inlined_call_operand.hbm [shape: f32[2,4,8,8], index: 8, kind: output, shape index: {}]
  %s9 = sld [smem:[#allocation0]]
  $region65: #{tpu_custom_call.1} parent=0
    _
  %s11 = ssub.s32 1, %s9
  %s12 = scalar_select 0, %s11, %s9
  $region1: #{tpu_custom_call.1} parent=0
    #allocation2 [shape = 'u8[8192]{0}', space=vmem, size = 0x2000, scoped, tag = 'output window, operand 0']
    #allocation3 [shape = 's32[2]{0}', space=sflag, size = 0x8, scoped, tag = 'scoped memory for tpu_custom_call.1']
    %13 = vsyncpa [#allocation3], 0
    %s14 = scalar_lea.sflag [#allocation3], 1
    %15 = vsyncpa %s14, 0
    loop: start=0, step=1, limit=10
    $region2: #{tpu_custom_call.1} parent=1 // loop_pre_header
      _
    $region3: #{tpu_custom_call.1} parent=1 // loop_header
      %s17 = sphi 0, %s21
      %p18 = scmp.ge.s32.totalorder %s17, 10
      %s24 = sphi 0, %s36
      %s25 = sphi 0, %s32
      %s26 = sphi 0, %s24
      %s27 = sphi 0, %s25
      %s28 = sphi 0, %s26
      %s29 = sphi 0, %s27
      %s39 = sphi 0, %s41
      %s42 = sphi 0, %s39
      %s43 = sphi 0, %s42
      %s59 = sphi 0, %s43
      %s65 = sphi 0, %s67
      %s68 = sphi 0, %s65
      %s69 = sphi 0, %s68
      %s85 = sphi 0, %s69
      %s91 = sphi 0, %s93
      %s94 = sphi 0, %s91
      %s95 = sphi 0, %s94
      %s111 = sphi 0, %s95
      %s117 = sphi 0, %s119
      %s120 = sphi 0, %s117
      %s121 = sphi 0, %s120
      %s137 = sphi 0, %s121
      %s143 = sphi 0, %s145
      %s146 = sphi 0, %s143
      %s147 = sphi 0, %s146
      %s163 = sphi 0, %s147
      %s169 = sphi 0, %s171
      %s172 = sphi 0, %s169
      %s173 = sphi 0, %s172
      %s189 = sphi 0, %s173
      %s195 = sphi 0, %s197
      %s198 = sphi 0, %s195
      %s199 = sphi 0, %s198
      %s215 = sphi 0, %s199
      %s221 = sphi 0, %s223
      %s224 = sphi 0, %s221
      %s225 = sphi 0, %s224
      %s241 = sphi 0, %s225
      %s249 = sphi 0, %s251
      %s252 = sphi 0, %s249
      %s253 = sphi 0, %s252
      %s269 = sphi 0, %s253
    $region4: #{tpu_custom_call.1} parent=1 // loop_header_branch
      %20 = sbr.rel (%p18) target = $region8
    $region5: #{tpu_custom_call.1} parent=1 // loop_body
      %s22 = ssub.s32 %s17, 1
      %s23 = ssub.s32 %s17, 2
      %s30 = sadd.s32 1, %s25
      %p31 = scmp.ge.s32.totalorder %s30, 4
      %s32 = scalar_select %p31, 0, %s30
      %s33 = sadd.s32 1, %s24
      %s34 = scalar_select %p31, %s33, %s24
      %p35 = scmp.ge.s32.totalorder %s34, 2
      %s36 = scalar_select %p35, 0, %s34
      %s37 = ssub.s32 %s24, %s36
      %p38 = scmp.eq.s32.totalorder %s37, 0
      %s40 = sadd.s32 %s39, 1
      %s41 = scalar_select %p38, %s39, %s40
      %p44 = pneg %p38
      %p45 = scmp.eq.s32.totalorder %s17, 7
      %p46 = por %p44, %p45
      %p47 = scmp.ne.s32.totalorder %s39, %s42
      %p48 = scmp.eq.s32.totalorder %s17, 0
      %p49 = por %p47, %p48
      %p50 = scmp.ne.s32.totalorder %s39, %s42
      %p51 = scmp.eq.s32.totalorder %s22, 7
      %p52 = por %p50, %p51
      %p53 = scmp.ne.s32.totalorder %s42, %s43
      %p54 = scmp.eq.s32.totalorder %s22, 0
      %p55 = por %p53, %p54
      %p56 = scmp.ne.s32.totalorder %s42, %s43
      %p57 = scmp.eq.s32.totalorder %s23, 7
      %p58 = por %p56, %p57
      %p60 = scmp.ne.s32.totalorder %s43, %s59
      %p61 = scmp.eq.s32.totalorder %s23, 0
      %p62 = por %p60, %p61
      %s63 = ssub.s32 %s24, %s36
      %p64 = scmp.eq.s32.totalorder %s63, 0
      %s66 = sadd.s32 %s65, 1
      %s67 = scalar_select %p64, %s65, %s66
      %p70 = pneg %p64
      %p71 = scmp.eq.s32.totalorder %s17, 7
      %p72 = por %p70, %p71
      %p73 = scmp.ne.s32.totalorder %s65, %s68
      %p74 = scmp.eq.s32.totalorder %s17, 0
      %p75 = por %p73, %p74
      %p76 = scmp.ne.s32.totalorder %s65, %s68
      %p77 = scmp.eq.s32.totalorder %s22, 7
      %p78 = por %p76, %p77
      %p79 = scmp.ne.s32.totalorder %s68, %s69
      %p80 = scmp.eq.s32.totalorder %s22, 0
      %p81 = por %p79, %p80
      %p82 = scmp.ne.s32.totalorder %s68, %s69
      %p83 = scmp.eq.s32.totalorder %s23, 7
      %p84 = por %p82, %p83
      %p86 = scmp.ne.s32.totalorder %s69, %s85
      %p87 = scmp.eq.s32.totalorder %s23, 0
      %p88 = por %p86, %p87
      %s89 = ssub.s32 %s25, %s32
      %p90 = scmp.eq.s32.totalorder %s89, 0
      %s92 = sadd.s32 %s91, 1
      %s93 = scalar_select %p90, %s91, %s92
      %p96 = pneg %p90
      %p97 = scmp.eq.s32.totalorder %s17, 7
      %p98 = por %p96, %p97
      %p99 = scmp.ne.s32.totalorder %s91, %s94
      %p100 = scmp.eq.s32.totalorder %s17, 0
      %p101 = por %p99, %p100
      %p102 = scmp.ne.s32.totalorder %s91, %s94
      %p103 = scmp.eq.s32.totalorder %s22, 7
      %p104 = por %p102, %p103
      %p105 = scmp.ne.s32.totalorder %s94, %s95
      %p106 = scmp.eq.s32.totalorder %s22, 0
      %p107 = por %p105, %p106
      %p108 = scmp.ne.s32.totalorder %s94, %s95
      %p109 = scmp.eq.s32.totalorder %s23, 7
      %p110 = por %p108, %p109
      %p112 = scmp.ne.s32.totalorder %s95, %s111
      %p113 = scmp.eq.s32.totalorder %s23, 0
      %p114 = por %p112, %p113
      %s115 = ssub.s32 %s25, %s32
      %p116 = scmp.eq.s32.totalorder %s115, 0
      %s118 = sadd.s32 %s117, 1
      %s119 = scalar_select %p116, %s117, %s118
      %p122 = pneg %p116
      %p123 = scmp.eq.s32.totalorder %s17, 7
      %p124 = por %p122, %p123
      %p125 = scmp.ne.s32.totalorder %s117, %s120
      %p126 = scmp.eq.s32.totalorder %s17, 0
      %p127 = por %p125, %p126
      %p128 = scmp.ne.s32.totalorder %s117, %s120
      %p129 = scmp.eq.s32.totalorder %s22, 7
      %p130 = por %p128, %p129
      %p131 = scmp.ne.s32.totalorder %s120, %s121
      %p132 = scmp.eq.s32.totalorder %s22, 0
      %p133 = por %p131, %p132
      %p134 = scmp.ne.s32.totalorder %s120, %s121
      %p135 = scmp.eq.s32.totalorder %s23, 7
      %p136 = por %p134, %p135
      %p138 = scmp.ne.s32.totalorder %s121, %s137
      %p139 = scmp.eq.s32.totalorder %s23, 0
      %p140 = por %p138, %p139
      %s141 = ssub.s32 %s25, %s32
      %p142 = scmp.eq.s32.totalorder %s141, 0
      %s144 = sadd.s32 %s143, 1
      %s145 = scalar_select %p142, %s143, %s144
      %p148 = pneg %p142
      %p149 = scmp.eq.s32.totalorder %s17, 7
      %p150 = por %p148, %p149
      %p151 = scmp.ne.s32.totalorder %s143, %s146
      %p152 = scmp.eq.s32.totalorder %s17, 0
      %p153 = por %p151, %p152
      %p154 = scmp.ne.s32.totalorder %s143, %s146
      %p155 = scmp.eq.s32.totalorder %s22, 7
      %p156 = por %p154, %p155
      %p157 = scmp.ne.s32.totalorder %s146, %s147
      %p158 = scmp.eq.s32.totalorder %s22, 0
      %p159 = por %p157, %p158
      %p160 = scmp.ne.s32.totalorder %s146, %s147
      %p161 = scmp.eq.s32.totalorder %s23, 7
      %p162 = por %p160, %p161
      %p164 = scmp.ne.s32.totalorder %s147, %s163
      %p165 = scmp.eq.s32.totalorder %s23, 0
      %p166 = por %p164, %p165
      %s167 = ssub.s32 %s25, %s32
      %p168 = scmp.eq.s32.totalorder %s167, 0
      %s170 = sadd.s32 %s169, 1
      %s171 = scalar_select %p168, %s169, %s170
      %p174 = pneg %p168
      %p175 = scmp.eq.s32.totalorder %s17, 7
      %p176 = por %p174, %p175
      %p177 = scmp.ne.s32.totalorder %s169, %s172
      %p178 = scmp.eq.s32.totalorder %s17, 0
      %p179 = por %p177, %p178
      %p180 = scmp.ne.s32.totalorder %s169, %s172
      %p181 = scmp.eq.s32.totalorder %s22, 7
      %p182 = por %p180, %p181
      %p183 = scmp.ne.s32.totalorder %s172, %s173
      %p184 = scmp.eq.s32.totalorder %s22, 0
      %p185 = por %p183, %p184
      %p186 = scmp.ne.s32.totalorder %s172, %s173
      %p187 = scmp.eq.s32.totalorder %s23, 7
      %p188 = por %p186, %p187
      %p190 = scmp.ne.s32.totalorder %s173, %s189
      %p191 = scmp.eq.s32.totalorder %s23, 0
      %p192 = por %p190, %p191
      %s193 = ssub.s32 %s25, %s32
      %p194 = scmp.eq.s32.totalorder %s193, 0
      %s196 = sadd.s32 %s195, 1
      %s197 = scalar_select %p194, %s195, %s196
      %p200 = pneg %p194
      %p201 = scmp.eq.s32.totalorder %s17, 7
      %p202 = por %p200, %p201
      %p203 = scmp.ne.s32.totalorder %s195, %s198
      %p204 = scmp.eq.s32.totalorder %s17, 0
      %p205 = por %p203, %p204
      %p206 = scmp.ne.s32.totalorder %s195, %s198
      %p207 = scmp.eq.s32.totalorder %s22, 7
      %p208 = por %p206, %p207
      %p209 = scmp.ne.s32.totalorder %s198, %s199
      %p210 = scmp.eq.s32.totalorder %s22, 0
      %p211 = por %p209, %p210
      %p212 = scmp.ne.s32.totalorder %s198, %s199
      %p213 = scmp.eq.s32.totalorder %s23, 7
      %p214 = por %p212, %p213
      %p216 = scmp.ne.s32.totalorder %s199, %s215
      %p217 = scmp.eq.s32.totalorder %s23, 0
      %p218 = por %p216, %p217
      %s219 = ssub.s32 %s25, %s32
      %p220 = scmp.eq.s32.totalorder %s219, 0
      %s222 = sadd.s32 %s221, 1
      %s223 = scalar_select %p220, %s221, %s222
      %p226 = pneg %p220
      %p227 = scmp.eq.s32.totalorder %s17, 7
      %p228 = por %p226, %p227
      %p229 = scmp.ne.s32.totalorder %s221, %s224
      %p230 = scmp.eq.s32.totalorder %s17, 0
      %p231 = por %p229, %p230
      %p232 = scmp.ne.s32.totalorder %s221, %s224
      %p233 = scmp.eq.s32.totalorder %s22, 7
      %p234 = por %p232, %p233
      %p235 = scmp.ne.s32.totalorder %s224, %s225
      %p236 = scmp.eq.s32.totalorder %s22, 0
      %p237 = por %p235, %p236
      %p238 = scmp.ne.s32.totalorder %s224, %s225
      %p239 = scmp.eq.s32.totalorder %s23, 7
      %p240 = por %p238, %p239
      %p242 = scmp.ne.s32.totalorder %s225, %s241
      %p243 = scmp.eq.s32.totalorder %s23, 0
      %p244 = por %p242, %p243
      %s245 = ssub.s32 %s24, %s36
      %s246 = ssub.s32 %s25, %s32
      %s247 = sor.u32 %s245, %s246
      %p248 = scmp.eq.s32.totalorder %s247, 0
      %s250 = sadd.s32 %s249, 1
      %s251 = scalar_select %p248, %s249, %s250
      %p254 = pneg %p248
      %p255 = scmp.eq.s32.totalorder %s17, 7
      %p256 = por %p254, %p255
      %p257 = scmp.ne.s32.totalorder %s249, %s252
      %p258 = scmp.eq.s32.totalorder %s17, 0
      %p259 = por %p257, %p258
      %p260 = scmp.ne.s32.totalorder %s249, %s252
      %p261 = scmp.eq.s32.totalorder %s22, 7
      %p262 = por %p260, %p261
      %p263 = scmp.ne.s32.totalorder %s252, %s253
      %p264 = scmp.eq.s32.totalorder %s22, 0
      %p265 = por %p263, %p264
      %p266 = scmp.ne.s32.totalorder %s252, %s253
      %p267 = scmp.eq.s32.totalorder %s23, 7
      %p268 = por %p266, %p267
      %p270 = scmp.ne.s32.totalorder %s253, %s269
      %p271 = scmp.eq.s32.totalorder %s23, 0
      %p272 = por %p270, %p271
      %p273 = scmp.le.s32.totalorder 1, %s17
      %p274 = scmp.lt.s32.totalorder %s17, 9
      %p275 = pnand %p273, %p274
      %p276 = pneg %p275
      // Predicated region
      $region9: #{tpu_custom_call.1} parent=5 // pred_check
        _
      $region10: #{tpu_custom_call.1} parent=5 // pred_check_branch
        %278 = sbr.rel (%p275) target = $region12
      $region11: #{tpu_custom_call.1} parent=5 // pred_region
        %s279 = ssub.s32 %s17, 1
      $region12: #{tpu_custom_call.1} parent=5 // pred_fallthru
        _
      %p280 = scmp.lt.s32.totalorder %s17, 8
      // Predicated region
      $region13: #{tpu_custom_call.1} parent=5 // pred_check
        %p281 = pneg %p280
      $region14: #{tpu_custom_call.1} parent=5 // pred_check_branch
        %283 = sbr.rel (%p281) target = $region16
      $region15: #{tpu_custom_call.1} parent=5 // pred_region
        // Predicated region
        $region17: #{tpu_custom_call.1} parent=15 // pred_check
          %p284 = pneg %p49
        $region18: #{tpu_custom_call.1} parent=15 // pred_check_branch
          %286 = sbr.rel (%p284) target = $region20
        $region19: #{tpu_custom_call.1} parent=15 // pred_region
          %p287 = scmp.lt.s32.totalorder %s24, 1
          %s288 = scalar_select %p287, %s24, 1
          %s289 = smul.addr %s288, 8
          %s290 = scalar_lea.vmem %s0, %s289
        $region20: #{tpu_custom_call.1} parent=15 // pred_fallthru
          _
        // Predicated region
        $region21: #{tpu_custom_call.1} parent=15 // pred_check
          %p291 = pneg %p75
        $region22: #{tpu_custom_call.1} parent=15 // pred_check_branch
          %293 = sbr.rel (%p291) target = $region24
        $region23: #{tpu_custom_call.1} parent=15 // pred_region
          %p294 = scmp.lt.s32.totalorder %s24, 1
          %s295 = scalar_select %p294, %s24, 1
          %s296 = scalar_lea.vmem %s1, %s295
        $region24: #{tpu_custom_call.1} parent=15 // pred_fallthru
          _
        // Predicated region
        $region25: #{tpu_custom_call.1} parent=15 // pred_check
          %p297 = pneg %p101
        $region26: #{tpu_custom_call.1} parent=15 // pred_check_branch
          %299 = sbr.rel (%p297) target = $region28
        $region27: #{tpu_custom_call.1} parent=15 // pred_region
          %p300 = scmp.lt.s32.totalorder %s25, 3
          %s301 = scalar_select %p300, %s25, 3
          %s302 = smul.addr %s301, 4
          %s303 = smul.addr %s302, 8
          %s304 = scalar_lea.vmem %s2, %s303
        $region28: #{tpu_custom_call.1} parent=15 // pred_fallthru
          _
        // Predicated region
        $region29: #{tpu_custom_call.1} parent=15 // pred_check
          %p305 = pneg %p127
        $region30: #{tpu_custom_call.1} parent=15 // pred_check_branch
          %307 = sbr.rel (%p305) target = $region32
        $region31: #{tpu_custom_call.1} parent=15 // pred_region
          %p308 = scmp.lt.s32.totalorder %s25, 3
          %s309 = scalar_select %p308, %s25, 3
          %s310 = smul.addr %s309, 4
          %s311 = smul.addr %s310, 8
          %s312 = scalar_lea.vmem %s3, %s311
        $region32: #{tpu_custom_call.1} parent=15 // pred_fallthru
          _
        // Predicated region
        $region33: #{tpu_custom_call.1} parent=15 // pred_check
          %p313 = pneg %p153
        $region34: #{tpu_custom_call.1} parent=15 // pred_check_branch
          %315 = sbr.rel (%p313) target = $region36
        $region35: #{tpu_custom_call.1} parent=15 // pred_region
          %p316 = scmp.lt.s32.totalorder %s25, 3
          %s317 = scalar_select %p316, %s25, 3
          %s318 = smul.addr %s317, 4
          %s319 = smul.addr %s318, 8
          %s320 = scalar_lea.vmem %s4, %s319
        $region36: #{tpu_custom_call.1} parent=15 // pred_fallthru
          _
        // Predicated region
        $region37: #{tpu_custom_call.1} parent=15 // pred_check
          %p321 = pneg %p179
        $region38: #{tpu_custom_call.1} parent=15 // pred_check_branch
          %323 = sbr.rel (%p321) target = $region40
        $region39: #{tpu_custom_call.1} parent=15 // pred_region
          %p324 = scmp.lt.s32.totalorder %s25, 3
          %s325 = scalar_select %p324, %s25, 3
          %s326 = scalar_lea.vmem %s5, %s325
        $region40: #{tpu_custom_call.1} parent=15 // pred_fallthru
          _
        // Predicated region
        $region41: #{tpu_custom_call.1} parent=15 // pred_check
          %p327 = pneg %p205
        $region42: #{tpu_custom_call.1} parent=15 // pred_check_branch
          %329 = sbr.rel (%p327) target = $region44
        $region43: #{tpu_custom_call.1} parent=15 // pred_region
          %p330 = scmp.lt.s32.totalorder %s25, 3
          %s331 = scalar_select %p330, %s25, 3
          %s332 = scalar_lea.vmem %s6, %s331
        $region44: #{tpu_custom_call.1} parent=15 // pred_fallthru
          _
        // Predicated region
        $region45: #{tpu_custom_call.1} parent=15 // pred_check
          %p333 = pneg %p231
        $region46: #{tpu_custom_call.1} parent=15 // pred_check_branch
          %335 = sbr.rel (%p333) target = $region48
        $region47: #{tpu_custom_call.1} parent=15 // pred_region
          %p336 = scmp.lt.s32.totalorder %s25, 3
          %s337 = scalar_select %p336, %s25, 3
          %s338 = scalar_lea.vmem %s7, %s337
        $region48: #{tpu_custom_call.1} parent=15 // pred_fallthru
          _
      $region16: #{tpu_custom_call.1} parent=5 // pred_fallthru
        _
      %p339 = scmp.le.s32.totalorder 1, %s17
      %p340 = scmp.lt.s32.totalorder %s17, 9
      %p341 = pnand %p339, %p340
      %p342 = pneg %p341
      // Predicated region
      $region49: #{tpu_custom_call.1} parent=5 // pred_check
        _
      $region50: #{tpu_custom_call.1} parent=5 // pred_check_branch
        %344 = sbr.rel (%p341) target = $region52
      $region51: #{tpu_custom_call.1} parent=5 // pred_region
        %s345 = ssub.s32 %s17, 1
        %p346 = scmp.lt.s32.totalorder %s26, 1
        %s347 = scalar_select %p346, %s26, 1
        %s348 = smul.addr %s347, 8
        %s349 = scalar_lea.vmem %s0, %s348
        %p350 = pneg %p55
        %p351 = pneg %p52
        %p352 = scmp.lt.s32.totalorder %s26, 1
        %s353 = scalar_select %p352, %s26, 1
        %s354 = scalar_lea.vmem %s1, %s353
        %p355 = pneg %p81
        %p356 = pneg %p78
        %p357 = scmp.lt.s32.totalorder %s27, 3
        %s358 = scalar_select %p357, %s27, 3
        %s359 = smul.addr %s358, 4
        %s360 = smul.addr %s359, 8
        %s361 = scalar_lea.vmem %s2, %s360
        %p362 = pneg %p107
        %p363 = pneg %p104
        %p364 = scmp.lt.s32.totalorder %s27, 3
        %s365 = scalar_select %p364, %s27, 3
        %s366 = smul.addr %s365, 4
        %s367 = smul.addr %s366, 8
        %s368 = scalar_lea.vmem %s3, %s367
        %p369 = pneg %p133
        %p370 = pneg %p130
        %p371 = scmp.lt.s32.totalorder %s27, 3
        %s372 = scalar_select %p371, %s27, 3
        %s373 = smul.addr %s372, 4
        %s374 = smul.addr %s373, 8
        %s375 = scalar_lea.vmem %s4, %s374
        %p376 = pneg %p159
        %p377 = pneg %p156
        %p378 = scmp.lt.s32.totalorder %s27, 3
        %s379 = scalar_select %p378, %s27, 3
        %s380 = scalar_lea.vmem %s5, %s379
        %p381 = pneg %p185
        %p382 = pneg %p182
        %p383 = scmp.lt.s32.totalorder %s27, 3
        %s384 = scalar_select %p383, %s27, 3
        %s385 = scalar_lea.vmem %s6, %s384
        %p386 = pneg %p211
        %p387 = pneg %p208
        %p388 = scmp.lt.s32.totalorder %s27, 3
        %s389 = scalar_select %p388, %s27, 3
        %s390 = scalar_lea.vmem %s7, %s389
        %p391 = pneg %p237
        %p392 = pneg %p234
        %p393 = pneg %p265
        %p394 = pneg %p262
        %s395 = sand.u32 %s252, 1
        %s396 = scalar_lea.sflag [#allocation3], %s395
        %s397 = sand.u32 %s252, 1
        %s398 = smul.addr %s397, 8
        %s399 = scalar_lea.vmem [#allocation2], %s398
        %p400 = scmp.lt.s32.totalorder %s26, 1
        %s401 = scalar_select %p400, %s26, 1
        %s402 = smul.addr %s401, 8
        %s403 = scalar_lea.vmem %s0, %s402
        %p404 = scmp.lt.s32.totalorder %s26, 1
        %s405 = scalar_select %p404, %s26, 1
        %s406 = scalar_lea.vmem %s1, %s405
        %p407 = scmp.lt.s32.totalorder %s27, 3
        %s408 = scalar_select %p407, %s27, 3
        %s409 = smul.addr %s408, 4
        %s410 = smul.addr %s409, 8
        %s411 = scalar_lea.vmem %s2, %s410
        %p412 = scmp.lt.s32.totalorder %s27, 3
        %s413 = scalar_select %p412, %s27, 3
        %s414 = smul.addr %s413, 4
        %s415 = smul.addr %s414, 8
        %s416 = scalar_lea.vmem %s3, %s415
        %p417 = scmp.lt.s32.totalorder %s27, 3
        %s418 = scalar_select %p417, %s27, 3
        %s419 = smul.addr %s418, 4
        %s420 = smul.addr %s419, 8
        %s421 = scalar_lea.vmem %s4, %s420
        %p422 = scmp.lt.s32.totalorder %s27, 3
        %s423 = scalar_select %p422, %s27, 3
        %s424 = scalar_lea.vmem %s5, %s423
        %p425 = scmp.lt.s32.totalorder %s27, 3
        %s426 = scalar_select %p425, %s27, 3
        %s427 = scalar_lea.vmem %s6, %s426
        %p428 = scmp.lt.s32.totalorder %s27, 3
        %s429 = scalar_select %p428, %s27, 3
        %s430 = scalar_lea.vmem %s7, %s429
        %v432 = vld [vmem:[%s403] sm:$0xff]
        %v433 = vpack.c.bf16 %v432, %v432
        %v434 = vld [vmem:[%s411] sm:$0xff]
        %v435 = vld [vmem:[%s411 + $0x8] sm:$0xff]
        %v436 = vld [vmem:[%s411 + $0x10] sm:$0xff]
        %v437 = vld [vmem:[%s411 + $0x18] sm:$0xff]
        %v438 = vpack.c.bf16 %v435, %v434
        %v439 = vpack.c.bf16 %v437, %v436
        %v440 = vld [vmem:[%s416] sm:$0xff]
        %v441 = vld [vmem:[%s416 + $0x8] sm:$0xff]
        %v442 = vld [vmem:[%s416 + $0x10] sm:$0xff]
        %v443 = vld [vmem:[%s416 + $0x18] sm:$0xff]
        %v444 = vpack.c.bf16 %v441, %v440
        %v445 = vpack.c.bf16 %v443, %v442
        %v446 = vld [vmem:[%s421] sm:$0xff]
        %v447 = vld [vmem:[%s421 + $0x8] sm:$0xff]
        %v448 = vld [vmem:[%s421 + $0x10] sm:$0xff]
        %v449 = vld [vmem:[%s421 + $0x18] sm:$0xff]
        %v450 = vpack.c.bf16 %v447, %v446
        %v451 = vpack.c.bf16 %v449, %v448
        %v452 = vld [vmem:[%s424] sm:$0x1]
        %v454 = vlaneseq
        %v455 = vshrl.u32 %v454, 7
        %v456 = vsub.s32 0, %v455
        %v457 = vrot.slane %v452, %v456
        %vm459 = vcmask 261120
        %v461 = vsel %vm459, %v433, 0
        %463 = vmatprep.subr.bf16.mxu0 0
        %464 = vmatpush1.bf16.msra.mxu0 %v438
        %465 = vmatprep.subr.bf16.mxu0 0
        %466 = vmatpush1.bf16.msra.mxu0 %v439
        %467 = vmatprep.subr.bf16.mxu0 0
        %468 = vmatpush1.bf16.msra.mxu0 0
        %469 = vmatprep.subr.bf16.mxu0 0
        %470 = vmatpush1.bf16.msra.mxu0 0
        %471 = vmatprep.subr.bf16.mxu0 0
        %472 = vmatpush1.bf16.msra.mxu0 0
        %473 = vmatprep.subr.bf16.mxu0 0
        %474 = vmatpush1.bf16.msra.mxu0 0
        %475 = vmatprep.subr.bf16.mxu0 0
        %476 = vmatpush1.bf16.msra.mxu0 0
        %477 = vmatprep.subr.bf16.mxu0 0
        %478 = vmatpush1.bf16.msra.mxu0 0
        %479 = vmatprep.subr.bf16.mxu0 0
        %480 = vmatpush1.bf16.msra.mxu0 0
        %481 = vmatprep.subr.bf16.mxu0 0
        %482 = vmatpush1.bf16.msra.mxu0 0
        %483 = vmatprep.subr.bf16.mxu0 0
        %484 = vmatpush1.bf16.msra.mxu0 0
        %485 = vmatprep.subr.bf16.mxu0 0
        %486 = vmatpush1.bf16.msra.mxu0 0
        %487 = vmatprep.subr.bf16.mxu0 0
        %488 = vmatpush1.bf16.msra.mxu0 0
        %489 = vmatprep.subr.bf16.mxu0 0
        %490 = vmatpush1.bf16.msra.mxu0 0
        %491 = vmatprep.subr.bf16.mxu0 0
        %492 = vmatpush1.bf16.msra.mxu0 0
        %493 = vmatprep.subr.bf16.mxu0 0
        %494 = vmatpush1.bf16.msra.mxu0 0
        %495 = vmatprep.mubr.bf16.mxu0 0
        %496 = vmatmul.mubr.bf16.gmra.mrb[0].mxu0 %v461
        %v497 = vpop.f32.mrb[0].mxu0
        %v498 = vadd.f32 %v457, %v497
        %v499 = vpop.f32.mrb[0].mxu0
        %v500 = vpop.f32.mrb[0].mxu0
        %v501 = vpop.f32.mrb[0].mxu0
        %502 = vdwg.mxu0
        %v503 = vld [vmem:[%s427] sm:$0x1]
        %v505 = vlaneseq
        %v506 = vshrl.u32 %v505, 7
        %v507 = vsub.s32 0, %v506
        %v508 = vrot.slane %v503, %v507
        %510 = vmatprep.subr.bf16.mxu0 0
        %511 = vmatpush1.bf16.msra.mxu0 %v444
        %512 = vmatprep.subr.bf16.mxu0 0
        %513 = vmatpush1.bf16.msra.mxu0 %v445
        %514 = vmatprep.subr.bf16.mxu0 0
        %515 = vmatpush1.bf16.msra.mxu0 0
        %516 = vmatprep.subr.bf16.mxu0 0
        %517 = vmatpush1.bf16.msra.mxu0 0
        %518 = vmatprep.subr.bf16.mxu0 0
        %519 = vmatpush1.bf16.msra.mxu0 0
        %520 = vmatprep.subr.bf16.mxu0 0
        %521 = vmatpush1.bf16.msra.mxu0 0
        %522 = vmatprep.subr.bf16.mxu0 0
        %523 = vmatpush1.bf16.msra.mxu0 0
        %524 = vmatprep.subr.bf16.mxu0 0
        %525 = vmatpush1.bf16.msra.mxu0 0
        %526 = vmatprep.subr.bf16.mxu0 0
        %527 = vmatpush1.bf16.msra.mxu0 0
        %528 = vmatprep.subr.bf16.mxu0 0
        %529 = vmatpush1.bf16.msra.mxu0 0
        %530 = vmatprep.subr.bf16.mxu0 0
        %531 = vmatpush1.bf16.msra.mxu0 0
        %532 = vmatprep.subr.bf16.mxu0 0
        %533 = vmatpush1.bf16.msra.mxu0 0
        %534 = vmatprep.subr.bf16.mxu0 0
        %535 = vmatpush1.bf16.msra.mxu0 0
        %536 = vmatprep.subr.bf16.mxu0 0
        %537 = vmatpush1.bf16.msra.mxu0 0
        %538 = vmatprep.subr.bf16.mxu0 0
        %539 = vmatpush1.bf16.msra.mxu0 0
        %540 = vmatprep.subr.bf16.mxu0 0
        %541 = vmatpush1.bf16.msra.mxu0 0
        %542 = vmatprep.mubr.bf16.mxu0 0
        %543 = vmatmul.mubr.bf16.gmra.mrb[0].mxu0 %v461
        %v544 = vpop.f32.mrb[0].mxu0
        %v545 = vadd.f32 %v508, %v544
        %v546 = vpop.f32.mrb[0].mxu0
        %v547 = vpop.f32.mrb[0].mxu0
        %v548 = vpop.f32.mrb[0].mxu0
        %549 = vdwg.mxu0
        %v550 = vld [vmem:[%s430] sm:$0x1]
        %v552 = vlaneseq
        %v553 = vshrl.u32 %v552, 7
        %v554 = vsub.s32 0, %v553
        %v555 = vrot.slane %v550, %v554
        %557 = vmatprep.subr.bf16.mxu0 0
        %558 = vmatpush1.bf16.msra.mxu0 %v450
        %559 = vmatprep.subr.bf16.mxu0 0
        %560 = vmatpush1.bf16.msra.mxu0 %v451
        %561 = vmatprep.subr.bf16.mxu0 0
        %562 = vmatpush1.bf16.msra.mxu0 0
        %563 = vmatprep.subr.bf16.mxu0 0
        %564 = vmatpush1.bf16.msra.mxu0 0
        %565 = vmatprep.subr.bf16.mxu0 0
        %566 = vmatpush1.bf16.msra.mxu0 0
        %567 = vmatprep.subr.bf16.mxu0 0
        %568 = vmatpush1.bf16.msra.mxu0 0
        %569 = vmatprep.subr.bf16.mxu0 0
        %570 = vmatpush1.bf16.msra.mxu0 0
        %571 = vmatprep.subr.bf16.mxu0 0
        %572 = vmatpush1.bf16.msra.mxu0 0
        %573 = vmatprep.subr.bf16.mxu0 0
        %574 = vmatpush1.bf16.msra.mxu0 0
        %575 = vmatprep.subr.bf16.mxu0 0
        %576 = vmatpush1.bf16.msra.mxu0 0
        %577 = vmatprep.subr.bf16.mxu0 0
        %578 = vmatpush1.bf16.msra.mxu0 0
        %579 = vmatprep.subr.bf16.mxu0 0
        %580 = vmatpush1.bf16.msra.mxu0 0
        %581 = vmatprep.subr.bf16.mxu0 0
        %582 = vmatpush1.bf16.msra.mxu0 0
        %583 = vmatprep.subr.bf16.mxu0 0
        %584 = vmatpush1.bf16.msra.mxu0 0
        %585 = vmatprep.subr.bf16.mxu0 0
        %586 = vmatpush1.bf16.msra.mxu0 0
        %587 = vmatprep.subr.bf16.mxu0 0
        %588 = vmatpush1.bf16.msra.mxu0 0
        %589 = vmatprep.mubr.bf16.mxu0 0
        %590 = vmatmul.mubr.bf16.gmra.mrb[0].mxu0 %v461
        %v591 = vpop.f32.mrb[0].mxu0
        %v592 = vadd.f32 %v555, %v591
        %v593 = vpop.f32.mrb[0].mxu0
        %v594 = vpop.f32.mrb[0].mxu0
        %v595 = vpop.f32.mrb[0].mxu0
        %596 = vdwg.mxu0
        %v597 = vpack.c.bf16 %v498, %v498
        %v598 = vpack.c.bf16 %v545, %v545
        %vm599 = vcmask 64512
        %v601 = vsel %vm599, %v597, 0
        %v604 = vsel %vm599, %v598, 0
        %606 = vmatprep.subr.bf16.mxu0 0
        %607 = vmatpush1.bf16.xpose.msra.mxu0 %v604
        %608 = vmatprep.subr.bf16.mxu0 0
        %609 = vmatpush1.bf16.xpose.msra.mxu0 0
        %610 = vmatprep.subr.bf16.mxu0 0
        %611 = vmatpush1.bf16.xpose.msra.mxu0 0
        %612 = vmatprep.subr.bf16.mxu0 0
        %613 = vmatpush1.bf16.xpose.msra.mxu0 0
        %614 = vmatprep.subr.bf16.mxu0 0
        %615 = vmatpush1.bf16.xpose.msra.mxu0 0
        %616 = vmatprep.subr.bf16.mxu0 0
        %617 = vmatpush1.bf16.xpose.msra.mxu0 0
        %618 = vmatprep.subr.bf16.mxu0 0
        %619 = vmatpush1.bf16.xpose.msra.mxu0 0
        %620 = vmatprep.subr.bf16.mxu0 0
        %621 = vmatpush1.bf16.xpose.msra.mxu0 0
        %622 = vmatprep.subr.bf16.mxu0 0
        %623 = vmatpush1.bf16.xpose.msra.mxu0 0
        %624 = vmatprep.subr.bf16.mxu0 0
        %625 = vmatpush1.bf16.xpose.msra.mxu0 0
        %626 = vmatprep.subr.bf16.mxu0 0
        %627 = vmatpush1.bf16.xpose.msra.mxu0 0
        %628 = vmatprep.subr.bf16.mxu0 0
        %629 = vmatpush1.bf16.xpose.msra.mxu0 0
        %630 = vmatprep.subr.bf16.mxu0 0
        %631 = vmatpush1.bf16.xpose.msra.mxu0 0
        %632 = vmatprep.subr.bf16.mxu0 0
        %633 = vmatpush1.bf16.xpose.msra.mxu0 0
        %634 = vmatprep.subr.bf16.mxu0 0
        %635 = vmatpush1.bf16.xpose.msra.mxu0 0
        %636 = vmatprep.subr.bf16.mxu0 0
        %637 = vmatpush1.bf16.xpose.msra.mxu0 0
        %638 = vmatprep.mubr.bf16.mxu0 0
        %639 = vmatmul.mubr.bf16.gmra.mrb[0].mxu0 %v601
        %v640 = vpop.f32.mrb[0].mxu0
        %v641 = vadd.f32 0.0, %v640
        %v642 = vpop.f32.mrb[0].mxu0
        %v643 = vpop.f32.mrb[0].mxu0
        %v644 = vpop.f32.mrb[0].mxu0
        %645 = vdwg.mxu0
        %v646 = vld [vmem:[%s406] sm:$0x1]
        %vm647 = vcmp.ne.f32.partialorder %v646, 0.0
        %v648 = vsel %vm647, 1, 0
        %v649 = vlaneseq
        %v650 = vshrl.u32 %v649, 7
        %v651 = vsub.s32 0, %v650
        %v652 = vrot.slane %v648, %v651
        %vm653 = vcmp.eq.s32.totalorder %v652, 1
        %v654 = vsel %vm653, %v641, -1e+09
        %v655 = vsel %vm599, %v654, -inf
        %656 = vmax.xlane.f32.xlu0 %v655
        %v657 = vpop.xlane.xlu0 %656
        %v658 = vsub.f32 %v654, %v657
        %v659 = vmul.f32 %v658, 1.442695
        %v660 = vpow.pop %v659
        %v661 = vsel %vm599, %v660, 0.0
        %662 = vadd.xlane.f32.xlu0 %v661
        %v663 = vpop.xlane.xlu0 %662
        %v664 = vpack.c.bf16 %v660, %v660
        %v665 = vpack.c.bf16 %v592, %v592
        %v667 = vsel %vm599, %v664, 0
        %vm669 = vcmask 1043456
        %v671 = vsel %vm669, %v665, 0
        %673 = vmatprep.subr.bf16.mxu0 0
        %674 = vmatpush1.bf16.msra.mxu0 %v671
        %675 = vmatprep.subr.bf16.mxu0 0
        %676 = vmatpush1.bf16.msra.mxu0 0
        %677 = vmatprep.subr.bf16.mxu0 0
        %678 = vmatpush1.bf16.msra.mxu0 0
        %679 = vmatprep.subr.bf16.mxu0 0
        %680 = vmatpush1.bf16.msra.mxu0 0
        %681 = vmatprep.subr.bf16.mxu0 0
        %682 = vmatpush1.bf16.msra.mxu0 0
        %683 = vmatprep.subr.bf16.mxu0 0
        %684 = vmatpush1.bf16.msra.mxu0 0
        %685 = vmatprep.subr.bf16.mxu0 0
        %686 = vmatpush1.bf16.msra.mxu0 0
        %687 = vmatprep.subr.bf16.mxu0 0
        %688 = vmatpush1.bf16.msra.mxu0 0
        %689 = vmatprep.subr.bf16.mxu0 0
        %690 = vmatpush1.bf16.msra.mxu0 0
        %691 = vmatprep.subr.bf16.mxu0 0
        %692 = vmatpush1.bf16.msra.mxu0 0
        %693 = vmatprep.subr.bf16.mxu0 0
        %694 = vmatpush1.bf16.msra.mxu0 0
        %695 = vmatprep.subr.bf16.mxu0 0
        %696 = vmatpush1.bf16.msra.mxu0 0
        %697 = vmatprep.subr.bf16.mxu0 0
        %698 = vmatpush1.bf16.msra.mxu0 0
        %699 = vmatprep.subr.bf16.mxu0 0
        %700 = vmatpush1.bf16.msra.mxu0 0
        %701 = vmatprep.subr.bf16.mxu0 0
        %702 = vmatpush1.bf16.msra.mxu0 0
        %703 = vmatprep.subr.bf16.mxu0 0
        %704 = vmatpush1.bf16.msra.mxu0 0
        %705 = vmatprep.mubr.bf16.mxu0 0
        %706 = vmatmul.mubr.bf16.gmra.mrb[0].mxu0 %v667
        %v707 = vpop.f32.mrb[0].mxu0
        %v708 = vadd.f32 0.0, %v707
        %v709 = vpop.f32.mrb[0].mxu0
        %v710 = vpop.f32.mrb[0].mxu0
        %v711 = vpop.f32.mrb[0].mxu0
        %712 = vdwg.mxu0
        %v713 = vrcp.pop %v663
        %v714 = vmul.f32 %v708, %v713
        %715 = vst.msk [vmem:[%s399] sm:$0xff] %vm599, %v714
        %s716 = sand.u32 %s252, 1
        %s717 = scalar_lea.sflag [#allocation3], %s716
        %s718 = sand.u32 %s252, 1
        %s719 = smul.addr %s718, 8
        %s720 = scalar_lea.vmem [#allocation2], %s719
        // Predicated region
        $region53: #{tpu_custom_call.1} parent=51 // pred_check
          %p721 = pneg %p262
        $region54: #{tpu_custom_call.1} parent=51 // pred_check_branch
          %723 = sbr.rel (%p721) target = $region56
        $region55: #{tpu_custom_call.1} parent=51 // pred_region
          %s725 = ssub.s32 128, 128
          %726 = vsyncadd %s717, %s725
          %s727 = smul.addr %s26, 4
          %s728 = sadd.s32 %s27, %s727
          %s729 = smul.addr %s728, 128
          %s730 = scalar_lea.hbm %s8, %s729
          %s732 = sshll.u32 %s720, 4
          %s733 = int_to_ptr.vmem [resolvable:$true] %s732
          %735 = dma.vmem_to_hbm [thread:$0]  %s733, 128, %s730, %s717
        $region56: #{tpu_custom_call.1} parent=51 // pred_fallthru
          _
      $region52: #{tpu_custom_call.1} parent=5 // pred_fallthru
        _
      %p736 = scmp.le.s32.totalorder 2, %s17
      // Predicated region
      $region57: #{tpu_custom_call.1} parent=5 // pred_check
        %p737 = pneg %p736
      $region58: #{tpu_custom_call.1} parent=5 // pred_check_branch
        %739 = sbr.rel (%p737) target = $region60
      $region59: #{tpu_custom_call.1} parent=5 // pred_region
        %s740 = ssub.s32 %s17, 2
        // Predicated region
        $region61: #{tpu_custom_call.1} parent=59 // pred_check
          %p741 = pneg %p268
        $region62: #{tpu_custom_call.1} parent=59 // pred_check_branch
          %743 = sbr.rel (%p741) target = $region64
        $region63: #{tpu_custom_call.1} parent=59 // pred_region
          %s744 = sand.u32 %s253, 1
          %s745 = scalar_lea.sflag [#allocation3], %s744
          %s746 = sand.u32 %s253, 1
          %s747 = smul.addr %s746, 8
          %s748 = scalar_lea.vmem [#allocation2], %s747
          %749 = dma.done %s745, 128
        $region64: #{tpu_custom_call.1} parent=59 // pred_fallthru
          _
      $region60: #{tpu_custom_call.1} parent=5 // pred_fallthru
        _
    $region6: #{tpu_custom_call.1} parent=1 // loop_footer
      %s21 = sadd.s32 1, %s17
    $region7: #{tpu_custom_call.1} parent=1 // loop_footer_branch
      %16 = sbr.rel target = $region3
    $region8: #{tpu_custom_call.1} parent=1 // loop_exit
      _
    %750 = vsyncpa [#allocation3], 1
    %s751 = scalar_lea.sflag [#allocation3], 1
    %752 = vsyncpa %s751, 1

</llo_original>
